<compile_context>
chip_gen: v6e
topology: v6e:2x2x1
jax: 0.10.0
libtpu: 0.0.40
codegen_flags: <defaults>
</compile_context>

<pallas_src>
import jax
import jax.numpy as jnp
from jax.experimental import pallas as pl
from jax.experimental.pallas import tpu as pltpu


LANE = 128


def _round_up(x, m):
    return ((x + m - 1) // m) * m


def fc_kernel(x_ref, w1_ref, b1_ref, w2_ref, b2_ref, w3_ref, b3_ref,
              w4_ref, b4_ref, o_ref):
    # 4 chained matmuls: bf16 operands -> f32 MXU accumulation, f32 bias + ReLU,
    # re-cast to bf16 between layers so every dot stays on the fast MXU path.
    h = jnp.dot(x_ref[...], w1_ref[...], preferred_element_type=jnp.float32)
    h = jnp.maximum(h + b1_ref[...], 0.0).astype(jnp.bfloat16)

    h = jnp.dot(h, w2_ref[...], preferred_element_type=jnp.float32)
    h = jnp.maximum(h + b2_ref[...], 0.0).astype(jnp.bfloat16)

    h = jnp.dot(h, w3_ref[...], preferred_element_type=jnp.float32)
    h = jnp.maximum(h + b3_ref[...], 0.0).astype(jnp.bfloat16)

    logits = jnp.dot(h, w4_ref[...], preferred_element_type=jnp.float32)
    o_ref[...] = (logits + b4_ref[...]).astype(o_ref.dtype)


def fc_network_forward(x, params, *, batch_tile=None):
    """Forward pass of FCNetwork.

    x: (B, C, H, W) float32 (NCHW, like PyTorch).
    params: dict with w1..w4 stored as (in, out) and b1..b4 as (1, out), f32.
    Returns logits of shape (B, feat_dim) in float32.
    """
    B = x.shape[0]
    x2d = x.reshape(B, -1).astype(jnp.float32)  # torch.nn.Flatten semantics

    in_dim = x2d.shape[1]
    h1 = params["w1"].shape[1]
    h2 = params["w2"].shape[1]
    h3 = params["w3"].shape[1]
    feat_dim = params["w4"].shape[1]

    # --- Lane-align every feature dimension to 128 (zero padding, exact math).
    in_p = _round_up(in_dim, LANE)
    h1p = _round_up(h1, LANE)
    h2p = _round_up(h2, LANE)
    h3p = _round_up(h3, LANE)
    fp = _round_up(feat_dim, LANE)

    def pad_w(w, rows, cols):
        return jnp.pad(w, ((0, rows - w.shape[0]), (0, cols - w.shape[1])))

    def pad_b(b, cols):
        return jnp.pad(b, ((0, 0), (0, cols - b.shape[1])))

    w1 = pad_w(params["w1"], in_p, h1p).astype(jnp.bfloat16)
    w2 = pad_w(params["w2"], h1p, h2p).astype(jnp.bfloat16)
    w3 = pad_w(params["w3"], h2p, h3p).astype(jnp.bfloat16)
    w4 = pad_w(params["w4"], h3p, fp).astype(jnp.bfloat16)
    b1 = pad_b(params["b1"], h1p).astype(jnp.float32)
    b2 = pad_b(params["b2"], h2p).astype(jnp.float32)
    b3 = pad_b(params["b3"], h3p).astype(jnp.float32)
    b4 = pad_b(params["b4"], fp).astype(jnp.float32)

    # --- Batch tiling: MXU-row-friendly tiles, grid over batch.
    if batch_tile is None:
        tb = min(256, _round_up(B, 8))  # 256 fits v5e/v6e/v7x MXU & VMEM budgets
    else:
        tb = batch_tile
    Bp = _round_up(B, tb)

    xp = jnp.pad(x2d, ((0, Bp - B), (0, in_p - in_dim))).astype(jnp.bfloat16)

    full = lambda shape: pl.BlockSpec(shape, lambda i: (0, 0))

    flops = 2 * Bp * (in_p * h1p + h1p * h2p + h2p * h3p + h3p * fp)
    bytes_accessed = (
        xp.size * 2
        + (w1.size + w2.size + w3.size + w4.size) * 2
        + (b1.size + b2.size + b3.size + b4.size) * 4
        + Bp * fp * 4
    )

    out = pl.pallas_call(
        fc_kernel,
        out_shape=jax.ShapeDtypeStruct((Bp, fp), jnp.float32),
        grid_spec=pltpu.PrefetchScalarGridSpec(
            num_scalar_prefetch=0,
            grid=(Bp // tb,),
            in_specs=[
                pl.BlockSpec((tb, in_p), lambda i: (i, 0)),     # x tile
                full((in_p, h1p)), full((1, h1p)),              # layer 1
                full((h1p, h2p)), full((1, h2p)),               # layer 2
                full((h2p, h3p)), full((1, h3p)),               # layer 3
                full((h3p, fp)), full((1, fp)),                 # layer 4
            ],
            out_specs=pl.BlockSpec((tb, fp), lambda i: (i, 0)),  # lane-dense out
        ),
        compiler_params=pltpu.CompilerParams(
            dimension_semantics=("parallel",)),
        cost_estimate=pl.CostEstimate(
            flops=flops, transcendentals=0, bytes_accessed=bytes_accessed),
    )(xp, w1, b1, w2, b2, w3, b3, w4, b4)

    # Strip batch / feature padding in plain JAX.
    return out[:B, :feat_dim]


def init_params(key, in_dim=784, feat_dim=2, hidden=100):
    """Init matching PyTorch Linear default U(-1/sqrt(fan_in), 1/sqrt(fan_in))."""
    dims = [(in_dim, hidden), (hidden, hidden), (hidden, hidden), (hidden, feat_dim)]
    params = {}
    for idx, (fan_in, fan_out) in enumerate(dims, start=1):
        key, kw, kb = jax.random.split(key, 3)
        bound = 1.0 / jnp.sqrt(float(fan_in))
        # stored as (in, out): kernel computes x @ W + b
        params[f"w{idx}"] = jax.random.uniform(
            kw, (fan_in, fan_out), jnp.float32, -bound, bound)
        params[f"b{idx}"] = jax.random.uniform(
            kb, (1, fan_out), jnp.float32, -bound, bound)
    return params


def reference_forward(x, params):
    h = x.reshape(x.shape[0], -1)
    h = jnp.maximum(h @ params["w1"] + params["b1"], 0.0)
    h = jnp.maximum(h @ params["w2"] + params["b2"], 0.0)
    h = jnp.maximum(h @ params["w3"] + params["b3"], 0.0)
    return h @ params["w4"] + params["b4"]


if __name__ == "__main__":
    key = jax.random.PRNGKey(0)
    k_params, k_x = jax.random.split(key)

    in_dim, feat_dim = 784, 2
    params = init_params(k_params, in_dim=in_dim, feat_dim=feat_dim, hidden=100)

    # Small MNIST-like batch: (B, C, H, W) = (8, 1, 28, 28) -> flatten -> 784
    x = jax.random.normal(k_x, (8, 1, 28, 28), jnp.float32)

    logits = fc_network_forward(x, params)
    logits = jax.block_until_ready(logits)

    ref = reference_forward(x, params)
    assert logits.shape == (8, feat_dim)
    # Kernel runs bf16 matmuls with f32 accumulation; compare vs f32 reference
    # with a tolerance covering bf16 operand rounding.
    assert jnp.allclose(logits, ref, atol=5e-2, rtol=5e-2), "mismatch vs reference"

    print("KERNEL_OK")
</pallas_src>

<mosaic_0001>
module attributes {stable_mosaic.version = 11 : i64} {
  func.func @fc_kernel(%arg0: i32, %arg1: memref<8x896xbf16, #tpu.memory_space<vmem>>, %arg2: memref<896x128xbf16, #tpu.memory_space<vmem>>, %arg3: memref<1x128xf32, #tpu.memory_space<vmem>>, %arg4: memref<128x128xbf16, #tpu.memory_space<vmem>>, %arg5: memref<1x128xf32, #tpu.memory_space<vmem>>, %arg6: memref<128x128xbf16, #tpu.memory_space<vmem>>, %arg7: memref<1x128xf32, #tpu.memory_space<vmem>>, %arg8: memref<128x128xbf16, #tpu.memory_space<vmem>>, %arg9: memref<1x128xf32, #tpu.memory_space<vmem>>, %arg10: memref<8x128xf32, #tpu.memory_space<vmem>>) attributes {dimension_semantics = [#tpu.dimension_semantics<parallel>], iteration_bounds = array<i64: 1>, scalar_prefetch = 0 : i64, scratch_operands = 0 : i64, tpu.core_type = #tpu.core_type<tc>, window_params = [{transform_indices = @transform_0, window_bounds = array<i64: 8, 896>}, {pipeline_mode = #tpu.pipeline_mode<synchronous>, transform_indices = @transform_1, window_bounds = array<i64: 896, 128>}, {pipeline_mode = #tpu.pipeline_mode<synchronous>, transform_indices = @transform_2, window_bounds = array<i64: 1, 128>}, {pipeline_mode = #tpu.pipeline_mode<synchronous>, transform_indices = @transform_3, window_bounds = array<i64: 128, 128>}, {pipeline_mode = #tpu.pipeline_mode<synchronous>, transform_indices = @transform_4, window_bounds = array<i64: 1, 128>}, {pipeline_mode = #tpu.pipeline_mode<synchronous>, transform_indices = @transform_5, window_bounds = array<i64: 128, 128>}, {pipeline_mode = #tpu.pipeline_mode<synchronous>, transform_indices = @transform_6, window_bounds = array<i64: 1, 128>}, {pipeline_mode = #tpu.pipeline_mode<synchronous>, transform_indices = @transform_7, window_bounds = array<i64: 128, 128>}, {pipeline_mode = #tpu.pipeline_mode<synchronous>, transform_indices = @transform_8, window_bounds = array<i64: 1, 128>}, {transform_indices = @transform_9, window_bounds = array<i64: 8, 128>}]} {
    %c0 = arith.constant 0 : index
    %c0_0 = arith.constant 0 : index
    %0 = vector.load %arg1[%c0, %c0_0] : memref<8x896xbf16, #tpu.memory_space<vmem>>, vector<8x896xbf16>
    %c0_1 = arith.constant 0 : index
    %c0_2 = arith.constant 0 : index
    %1 = vector.load %arg2[%c0_1, %c0_2] : memref<896x128xbf16, #tpu.memory_space<vmem>>, vector<896x128xbf16>
    %cst = arith.constant dense<0.000000e+00> : vector<8x128xf32>
    %2 = tpu.matmul %0, %1, %cst {dimension_numbers = #tpu.dot_dimension_numbers<[1], [0], [0], [1], [0, 0, 1, 1], [], []>} : vector<8x896xbf16>, vector<896x128xbf16>, vector<8x128xf32> -> vector<8x128xf32>
    %c0_3 = arith.constant 0 : index
    %c0_4 = arith.constant 0 : index
    %3 = vector.load %arg3[%c0_3, %c0_4] : memref<1x128xf32, #tpu.memory_space<vmem>>, vector<1x128xf32>
    %4 = vector.broadcast %3 : vector<1x128xf32> to vector<8x128xf32>
    %5 = arith.addf %2, %4 : vector<8x128xf32>
    %cst_5 = arith.constant 0.000000e+00 : f32
    %6 = vector.broadcast %cst_5 : f32 to vector<8x128xf32>
    %7 = arith.maximumf %5, %6 : vector<8x128xf32>
    %8 = arith.truncf %7 : vector<8x128xf32> to vector<8x128xbf16>
    %c0_6 = arith.constant 0 : index
    %c0_7 = arith.constant 0 : index
    %9 = vector.load %arg4[%c0_6, %c0_7] : memref<128x128xbf16, #tpu.memory_space<vmem>>, vector<128x128xbf16>
    %cst_8 = arith.constant dense<0.000000e+00> : vector<8x128xf32>
    %10 = tpu.matmul %8, %9, %cst_8 {dimension_numbers = #tpu.dot_dimension_numbers<[1], [0], [0], [1], [0, 0, 1, 1], [], []>} : vector<8x128xbf16>, vector<128x128xbf16>, vector<8x128xf32> -> vector<8x128xf32>
    %c0_9 = arith.constant 0 : index
    %c0_10 = arith.constant 0 : index
    %11 = vector.load %arg5[%c0_9, %c0_10] : memref<1x128xf32, #tpu.memory_space<vmem>>, vector<1x128xf32>
    %12 = vector.broadcast %11 : vector<1x128xf32> to vector<8x128xf32>
    %13 = arith.addf %10, %12 : vector<8x128xf32>
    %cst_11 = arith.constant 0.000000e+00 : f32
    %14 = vector.broadcast %cst_11 : f32 to vector<8x128xf32>
    %15 = arith.maximumf %13, %14 : vector<8x128xf32>
    %16 = arith.truncf %15 : vector<8x128xf32> to vector<8x128xbf16>
    %c0_12 = arith.constant 0 : index
    %c0_13 = arith.constant 0 : index
    %17 = vector.load %arg6[%c0_12, %c0_13] : memref<128x128xbf16, #tpu.memory_space<vmem>>, vector<128x128xbf16>
    %cst_14 = arith.constant dense<0.000000e+00> : vector<8x128xf32>
    %18 = tpu.matmul %16, %17, %cst_14 {dimension_numbers = #tpu.dot_dimension_numbers<[1], [0], [0], [1], [0, 0, 1, 1], [], []>} : vector<8x128xbf16>, vector<128x128xbf16>, vector<8x128xf32> -> vector<8x128xf32>
    %c0_15 = arith.constant 0 : index
    %c0_16 = arith.constant 0 : index
    %19 = vector.load %arg7[%c0_15, %c0_16] : memref<1x128xf32, #tpu.memory_space<vmem>>, vector<1x128xf32>
    %20 = vector.broadcast %19 : vector<1x128xf32> to vector<8x128xf32>
    %21 = arith.addf %18, %20 : vector<8x128xf32>
    %cst_17 = arith.constant 0.000000e+00 : f32
    %22 = vector.broadcast %cst_17 : f32 to vector<8x128xf32>
    %23 = arith.maximumf %21, %22 : vector<8x128xf32>
    %24 = arith.truncf %23 : vector<8x128xf32> to vector<8x128xbf16>
    %c0_18 = arith.constant 0 : index
    %c0_19 = arith.constant 0 : index
    %25 = vector.load %arg8[%c0_18, %c0_19] : memref<128x128xbf16, #tpu.memory_space<vmem>>, vector<128x128xbf16>
    %cst_20 = arith.constant dense<0.000000e+00> : vector<8x128xf32>
    %26 = tpu.matmul %24, %25, %cst_20 {dimension_numbers = #tpu.dot_dimension_numbers<[1], [0], [0], [1], [0, 0, 1, 1], [], []>} : vector<8x128xbf16>, vector<128x128xbf16>, vector<8x128xf32> -> vector<8x128xf32>
    %c0_21 = arith.constant 0 : index
    %c0_22 = arith.constant 0 : index
    %27 = vector.load %arg9[%c0_21, %c0_22] : memref<1x128xf32, #tpu.memory_space<vmem>>, vector<1x128xf32>
    %28 = vector.broadcast %27 : vector<1x128xf32> to vector<8x128xf32>
    %29 = arith.addf %26, %28 : vector<8x128xf32>
    %c0_23 = arith.constant 0 : index
    %c0_24 = arith.constant 0 : index
    %30 = vector.load %arg10[%c0_23, %c0_24] : memref<8x128xf32, #tpu.memory_space<vmem>>, vector<8x128xf32>
    tpu.vector_store %arg10[%c0_23, %c0_24], %29 {strides = array<i32>} : memref<8x128xf32, #tpu.memory_space<vmem>>, vector<8x128xf32>,
    return
  }
  func.func @transform_0(%arg0: i32) -> (i32, i32) {
    %c0_i32 = arith.constant 0 : i32
    %c0_i32_0 = arith.constant 0 : i32
    return %arg0, %c0_i32 : i32, i32
  }
  func.func @transform_1(%arg0: i32) -> (i32, i32) {
    %c0_i32 = arith.constant 0 : i32
    %c0_i32_0 = arith.constant 0 : i32
    %c0_i32_1 = arith.constant 0 : i32
    return %c0_i32, %c0_i32_0 : i32, i32
  }
  func.func @transform_2(%arg0: i32) -> (i32, i32) {
    %c0_i32 = arith.constant 0 : i32
    %c0_i32_0 = arith.constant 0 : i32
    %c0_i32_1 = arith.constant 0 : i32
    return %c0_i32, %c0_i32_0 : i32, i32
  }
  func.func @transform_3(%arg0: i32) -> (i32, i32) {
    %c0_i32 = arith.constant 0 : i32
    %c0_i32_0 = arith.constant 0 : i32
    %c0_i32_1 = arith.constant 0 : i32
    return %c0_i32, %c0_i32_0 : i32, i32
  }
  func.func @transform_4(%arg0: i32) -> (i32, i32) {
    %c0_i32 = arith.constant 0 : i32
    %c0_i32_0 = arith.constant 0 : i32
    %c0_i32_1 = arith.constant 0 : i32
    return %c0_i32, %c0_i32_0 : i32, i32
  }
  func.func @transform_5(%arg0: i32) -> (i32, i32) {
    %c0_i32 = arith.constant 0 : i32
    %c0_i32_0 = arith.constant 0 : i32
    %c0_i32_1 = arith.constant 0 : i32
    return %c0_i32, %c0_i32_0 : i32, i32
  }
  func.func @transform_6(%arg0: i32) -> (i32, i32) {
    %c0_i32 = arith.constant 0 : i32
    %c0_i32_0 = arith.constant 0 : i32
    %c0_i32_1 = arith.constant 0 : i32
    return %c0_i32, %c0_i32_0 : i32, i32
  }
  func.func @transform_7(%arg0: i32) -> (i32, i32) {
    %c0_i32 = arith.constant 0 : i32
    %c0_i32_0 = arith.constant 0 : i32
    %c0_i32_1 = arith.constant 0 : i32
    return %c0_i32, %c0_i32_0 : i32, i32
  }
  func.func @transform_8(%arg0: i32) -> (i32, i32) {
    %c0_i32 = arith.constant 0 : i32
    %c0_i32_0 = arith.constant 0 : i32
    %c0_i32_1 = arith.constant 0 : i32
    return %c0_i32, %c0_i32_0 : i32, i32
  }
  func.func @transform_9(%arg0: i32) -> (i32, i32) {
    %c0_i32 = arith.constant 0 : i32
    %c0_i32_0 = arith.constant 0 : i32
    return %arg0, %c0_i32 : i32, i32
  }
}

</mosaic_0001>

<llo_original>
// kernel: tpu_custom_call.1
$region0: #{tpu_custom_call.1}
  #allocation0 [shape = 'u32[]', space=smem, size = 0x4, offset = 0x4, fixed_abs, tag = 'smem constant byte address 0x4 - core index']
  #allocation1 [shape = 'u32[144,128]{1,0:T(1,128)}', space=vmem, size = 0x12000, scoped, tag = 'internal scratch']
  %s0 = inlined_call_operand.hbm [shape: bf16[8,896], index: 0, kind: input, shape index: {}]
  %s1 = inlined_call_operand.hbm [shape: bf16[896,128], index: 1, kind: input, shape index: {}]
  %s2 = inlined_call_operand.vmem [shape: f32[1,128], index: 2, kind: input, shape index: {}]
  %s3 = inlined_call_operand.hbm [shape: bf16[128,128], index: 3, kind: input, shape index: {}]
  %s4 = inlined_call_operand.vmem [shape: f32[1,128], index: 4, kind: input, shape index: {}]
  %s5 = inlined_call_operand.hbm [shape: bf16[128,128], index: 5, kind: input, shape index: {}]
  %s6 = inlined_call_operand.vmem [shape: f32[1,128], index: 6, kind: input, shape index: {}]
  %s7 = inlined_call_operand.hbm [shape: bf16[128,128], index: 7, kind: input, shape index: {}]
  %s8 = inlined_call_operand.vmem [shape: f32[1,128], index: 8, kind: input, shape index: {}]
  %s9 = inlined_call_operand.hbm [shape: f32[8,128], index: 9, kind: output, shape index: {}]
  %s10 = sld [smem:[#allocation0]]
  $region66: #{tpu_custom_call.1} parent=0
    _
  %s12 = ssub.s32 1, %s10
  %s13 = scalar_select 0, %s12, %s10
  $region1: #{tpu_custom_call.1} parent=0
    #allocation2 [shape = 'u8[14336]{0}', space=vmem, size = 0x3800, scoped, tag = 'input window, operand 0, single buffered']
    #allocation3 [shape = 's32[1]{0}', space=sflag, size = 0x4, scoped, tag = 'scoped memory for tpu_custom_call.1']
    #allocation4 [shape = 's32[1]{0}', space=sflag, size = 0x4, scoped, tag = 'scoped memory for tpu_custom_call.1']
    #allocation5 [shape = 'u8[229376]{0}', space=vmem, size = 0x38000, scoped, tag = 'input window, operand 1, single buffered']
    #allocation6 [shape = 's32[1]{0}', space=sflag, size = 0x4, scoped, tag = 'scoped memory for tpu_custom_call.1']
    #allocation7 [shape = 'u8[32768]{0}', space=vmem, size = 0x8000, scoped, tag = 'input window, operand 3, single buffered']
    #allocation8 [shape = 'u8[32768]{0}', space=vmem, size = 0x8000, scoped, tag = 'input window, operand 5, single buffered']
    #allocation9 [shape = 's32[1]{0}', space=sflag, size = 0x4, scoped, tag = 'scoped memory for tpu_custom_call.1']
    #allocation10 [shape = 'u8[32768]{0}', space=vmem, size = 0x8000, scoped, tag = 'input window, operand 7, single buffered']
    #allocation11 [shape = 'u8[4096]{0}', space=vmem, size = 0x1000, scoped, tag = 'output window, operand 0, single buffered']
    %14 = vsyncpa [#allocation3], 0
    %15 = vsyncpa [#allocation6], 0
    %16 = vsyncpa [#allocation9], 0
    %17 = vsyncpa [#allocation4], 0
    // Predicated region
    $region2: #{tpu_custom_call.1} parent=1 // pred_check
      _
    $region3: #{tpu_custom_call.1} parent=1 // pred_check_branch
      %19 = sbr.rel (0) target = $region5
    $region4: #{tpu_custom_call.1} parent=1 // pred_region
      %s21 = ssub.s32 448, 448
      %22 = vsyncadd [#allocation3], %s21
      %s24 = sshll.u32 [#allocation2], 4
      %s25 = int_to_ptr.vmem [resolvable:$true] %s24
      %27 = dma.hbm_to_vmem [thread:$0]  %s0, 448, %s25, [#allocation3]
    $region5: #{tpu_custom_call.1} parent=1 // pred_fallthru
      _
    // Predicated region
    $region6: #{tpu_custom_call.1} parent=1 // pred_check
      _
    $region7: #{tpu_custom_call.1} parent=1 // pred_check_branch
      %29 = sbr.rel (0) target = $region9
    $region8: #{tpu_custom_call.1} parent=1 // pred_region
      %s31 = ssub.s32 7168, 7168
      %32 = vsyncadd [#allocation6], %s31
      %s33 = sshll.u32 [#allocation5], 4
      %s34 = int_to_ptr.vmem [resolvable:$true] %s33
      %39 = dma.hbm_to_vmem [thread:$0]  %s1, 7168, %s34, [#allocation6], 64, 64, 4
    $region9: #{tpu_custom_call.1} parent=1 // pred_fallthru
      _
    // Predicated region
    $region10: #{tpu_custom_call.1} parent=1 // pred_check
      _
    $region11: #{tpu_custom_call.1} parent=1 // pred_check_branch
      %41 = sbr.rel (0) target = $region13
    $region12: #{tpu_custom_call.1} parent=1 // pred_region
      _
    $region13: #{tpu_custom_call.1} parent=1 // pred_fallthru
      _
    // Predicated region
    $region14: #{tpu_custom_call.1} parent=1 // pred_check
      _
    $region15: #{tpu_custom_call.1} parent=1 // pred_check_branch
      %43 = sbr.rel (0) target = $region17
    $region16: #{tpu_custom_call.1} parent=1 // pred_region
      %s45 = ssub.s32 1024, 1024
      %46 = vsyncadd [#allocation6], %s45
      %s47 = sshll.u32 [#allocation7], 4
      %s48 = int_to_ptr.vmem [resolvable:$true] %s47
      %53 = dma.hbm_to_vmem [thread:$0]  %s3, 1024, %s48, [#allocation6], 64, 64, 4
    $region17: #{tpu_custom_call.1} parent=1 // pred_fallthru
      _
    // Predicated region
    $region18: #{tpu_custom_call.1} parent=1 // pred_check
      _
    $region19: #{tpu_custom_call.1} parent=1 // pred_check_branch
      %55 = sbr.rel (0) target = $region21
    $region20: #{tpu_custom_call.1} parent=1 // pred_region
      _
    $region21: #{tpu_custom_call.1} parent=1 // pred_fallthru
      _
    // Predicated region
    $region22: #{tpu_custom_call.1} parent=1 // pred_check
      _
    $region23: #{tpu_custom_call.1} parent=1 // pred_check_branch
      %57 = sbr.rel (0) target = $region25
    $region24: #{tpu_custom_call.1} parent=1 // pred_region
      %s59 = ssub.s32 1024, 1024
      %60 = vsyncadd [#allocation9], %s59
      %s61 = sshll.u32 [#allocation8], 4
      %s62 = int_to_ptr.vmem [resolvable:$true] %s61
      %67 = dma.hbm_to_vmem [thread:$0]  %s5, 1024, %s62, [#allocation9], 64, 64, 4
    $region25: #{tpu_custom_call.1} parent=1 // pred_fallthru
      _
    // Predicated region
    $region26: #{tpu_custom_call.1} parent=1 // pred_check
      _
    $region27: #{tpu_custom_call.1} parent=1 // pred_check_branch
      %69 = sbr.rel (0) target = $region29
    $region28: #{tpu_custom_call.1} parent=1 // pred_region
      _
    $region29: #{tpu_custom_call.1} parent=1 // pred_fallthru
      _
    // Predicated region
    $region30: #{tpu_custom_call.1} parent=1 // pred_check
      _
    $region31: #{tpu_custom_call.1} parent=1 // pred_check_branch
      %71 = sbr.rel (0) target = $region33
    $region32: #{tpu_custom_call.1} parent=1 // pred_region
      %s73 = ssub.s32 1024, 1024
      %74 = vsyncadd [#allocation9], %s73
      %s75 = sshll.u32 [#allocation10], 4
      %s76 = int_to_ptr.vmem [resolvable:$true] %s75
      %81 = dma.hbm_to_vmem [thread:$0]  %s7, 1024, %s76, [#allocation9], 64, 64, 4
    $region33: #{tpu_custom_call.1} parent=1 // pred_fallthru
      _
    // Predicated region
    $region34: #{tpu_custom_call.1} parent=1 // pred_check
      _
    $region35: #{tpu_custom_call.1} parent=1 // pred_check_branch
      %83 = sbr.rel (0) target = $region37
    $region36: #{tpu_custom_call.1} parent=1 // pred_region
      _
    $region37: #{tpu_custom_call.1} parent=1 // pred_fallthru
      _
    // Predicated region
    $region38: #{tpu_custom_call.1} parent=1 // pred_check
      _
    $region39: #{tpu_custom_call.1} parent=1 // pred_check_branch
      %85 = sbr.rel (0) target = $region41
    $region40: #{tpu_custom_call.1} parent=1 // pred_region
      %86 = dma.done [#allocation3], 448
    $region41: #{tpu_custom_call.1} parent=1 // pred_fallthru
      _
    // Predicated region
    $region42: #{tpu_custom_call.1} parent=1 // pred_check
      _
    $region43: #{tpu_custom_call.1} parent=1 // pred_check_branch
      %88 = sbr.rel (0) target = $region45
    $region44: #{tpu_custom_call.1} parent=1 // pred_region
      %89 = dma.done [#allocation6], 7168
    $region45: #{tpu_custom_call.1} parent=1 // pred_fallthru
      _
    // Predicated region
    $region46: #{tpu_custom_call.1} parent=1 // pred_check
      _
    $region47: #{tpu_custom_call.1} parent=1 // pred_check_branch
      %91 = sbr.rel (0) target = $region49
    $region48: #{tpu_custom_call.1} parent=1 // pred_region
      %92 = dma.done [#allocation6], 1024
    $region49: #{tpu_custom_call.1} parent=1 // pred_fallthru
      _
    // Predicated region
    $region50: #{tpu_custom_call.1} parent=1 // pred_check
      _
    $region51: #{tpu_custom_call.1} parent=1 // pred_check_branch
      %94 = sbr.rel (0) target = $region53
    $region52: #{tpu_custom_call.1} parent=1 // pred_region
      %95 = dma.done [#allocation9], 1024
    $region53: #{tpu_custom_call.1} parent=1 // pred_fallthru
      _
    // Predicated region
    $region54: #{tpu_custom_call.1} parent=1 // pred_check
      _
    $region55: #{tpu_custom_call.1} parent=1 // pred_check_branch
      %97 = sbr.rel (0) target = $region57
    $region56: #{tpu_custom_call.1} parent=1 // pred_region
      %98 = dma.done [#allocation9], 1024
    $region57: #{tpu_custom_call.1} parent=1 // pred_fallthru
      _
    %v100 = vld [vmem:[#allocation2] sm:$0xff]
    %v101 = vld [vmem:[#allocation2 + $0x8] sm:$0xff]
    %v102 = vld [vmem:[#allocation2 + $0x10] sm:$0xff]
    %v103 = vld [vmem:[#allocation2 + $0x18] sm:$0xf]
    %v104 = vld [vmem:[#allocation5] sm:$0xf]
    %v105 = vld [vmem:[#allocation5 + $0x4] sm:$0xf]
    %v106 = vld [vmem:[#allocation5 + $0x8] sm:$0xf]
    %v107 = vld [vmem:[#allocation5 + $0xc] sm:$0xf]
    %v108 = vld [vmem:[#allocation5 + $0x10] sm:$0xf]
    %v109 = vld [vmem:[#allocation5 + $0x14] sm:$0xf]
    %v110 = vld [vmem:[#allocation5 + $0x18] sm:$0xf]
    %v111 = vld [vmem:[#allocation5 + $0x1c] sm:$0xf]
    %v112 = vld [vmem:[#allocation5 + $0x20] sm:$0xf]
    %v113 = vld [vmem:[#allocation5 + $0x24] sm:$0xf]
    %v114 = vld [vmem:[#allocation5 + $0x28] sm:$0xf]
    %v115 = vld [vmem:[#allocation5 + $0x2c] sm:$0xf]
    %v116 = vld [vmem:[#allocation5 + $0x30] sm:$0xf]
    %v117 = vld [vmem:[#allocation5 + $0x34] sm:$0xf]
    %v118 = vld [vmem:[#allocation5 + $0x38] sm:$0xf]
    %v119 = vld [vmem:[#allocation5 + $0x3c] sm:$0xf]
    %v120 = vld [vmem:[#allocation5 + $0x40] sm:$0xf]
    %v121 = vld [vmem:[#allocation5 + $0x44] sm:$0xf]
    %v122 = vld [vmem:[#allocation5 + $0x48] sm:$0xf]
    %v123 = vld [vmem:[#allocation5 + $0x4c] sm:$0xf]
    %v124 = vld [vmem:[#allocation5 + $0x50] sm:$0xf]
    %v125 = vld [vmem:[#allocation5 + $0x54] sm:$0xf]
    %v126 = vld [vmem:[#allocation5 + $0x58] sm:$0xf]
    %v127 = vld [vmem:[#allocation5 + $0x5c] sm:$0xf]
    %v128 = vld [vmem:[#allocation5 + $0x60] sm:$0xf]
    %v129 = vld [vmem:[#allocation5 + $0x64] sm:$0xf]
    %v130 = vld [vmem:[#allocation5 + $0x68] sm:$0xf]
    %v131 = vld [vmem:[#allocation5 + $0x6c] sm:$0xf]
    %v132 = vld [vmem:[#allocation5 + $0x70] sm:$0xf]
    %v133 = vld [vmem:[#allocation5 + $0x74] sm:$0xf]
    %v134 = vld [vmem:[#allocation5 + $0x78] sm:$0xf]
    %v135 = vld [vmem:[#allocation5 + $0x7c] sm:$0xf]
    %v136 = vld [vmem:[#allocation5 + $0x80] sm:$0xf]
    %v137 = vld [vmem:[#allocation5 + $0x84] sm:$0xf]
    %v138 = vld [vmem:[#allocation5 + $0x88] sm:$0xf]
    %v139 = vld [vmem:[#allocation5 + $0x8c] sm:$0xf]
    %v140 = vld [vmem:[#allocation5 + $0x90] sm:$0xf]
    %v141 = vld [vmem:[#allocation5 + $0x94] sm:$0xf]
    %v142 = vld [vmem:[#allocation5 + $0x98] sm:$0xf]
    %v143 = vld [vmem:[#allocation5 + $0x9c] sm:$0xf]
    %v144 = vld [vmem:[#allocation5 + $0xa0] sm:$0xf]
    %v145 = vld [vmem:[#allocation5 + $0xa4] sm:$0xf]
    %v146 = vld [vmem:[#allocation5 + $0xa8] sm:$0xf]
    %v147 = vld [vmem:[#allocation5 + $0xac] sm:$0xf]
    %v148 = vld [vmem:[#allocation5 + $0xb0] sm:$0xf]
    %v149 = vld [vmem:[#allocation5 + $0xb4] sm:$0xf]
    %v150 = vld [vmem:[#allocation5 + $0xb8] sm:$0xf]
    %v151 = vld [vmem:[#allocation5 + $0xbc] sm:$0xf]
    %v152 = vld [vmem:[#allocation5 + $0xc0] sm:$0xf]
    %v153 = vld [vmem:[#allocation5 + $0xc4] sm:$0xf]
    %v154 = vld [vmem:[#allocation5 + $0xc8] sm:$0xf]
    %v155 = vld [vmem:[#allocation5 + $0xcc] sm:$0xf]
    %v156 = vld [vmem:[#allocation5 + $0xd0] sm:$0xf]
    %v157 = vld [vmem:[#allocation5 + $0xd4] sm:$0xf]
    %v158 = vld [vmem:[#allocation5 + $0xd8] sm:$0xf]
    %v159 = vld [vmem:[#allocation5 + $0xdc] sm:$0xf]
    %v160 = vld [vmem:[#allocation5 + $0xe0] sm:$0xf]
    %v161 = vld [vmem:[#allocation5 + $0xe4] sm:$0xf]
    %v162 = vld [vmem:[#allocation5 + $0xe8] sm:$0xf]
    %v163 = vld [vmem:[#allocation5 + $0xec] sm:$0xf]
    %v164 = vld [vmem:[#allocation5 + $0xf0] sm:$0xf]
    %v165 = vld [vmem:[#allocation5 + $0xf4] sm:$0xf]
    %v166 = vld [vmem:[#allocation5 + $0xf8] sm:$0xf]
    %v167 = vld [vmem:[#allocation5 + $0xfc] sm:$0xf]
    %v168 = vld [vmem:[#allocation5 + $0x100] sm:$0xf]
    %v169 = vld [vmem:[#allocation5 + $0x104] sm:$0xf]
    %v170 = vld [vmem:[#allocation5 + $0x108] sm:$0xf]
    %v171 = vld [vmem:[#allocation5 + $0x10c] sm:$0xf]
    %v172 = vld [vmem:[#allocation5 + $0x110] sm:$0xf]
    %v173 = vld [vmem:[#allocation5 + $0x114] sm:$0xf]
    %v174 = vld [vmem:[#allocation5 + $0x118] sm:$0xf]
    %v175 = vld [vmem:[#allocation5 + $0x11c] sm:$0xf]
    %v176 = vld [vmem:[#allocation5 + $0x120] sm:$0xf]
    %v177 = vld [vmem:[#allocation5 + $0x124] sm:$0xf]
    %v178 = vld [vmem:[#allocation5 + $0x128] sm:$0xf]
    %v179 = vld [vmem:[#allocation5 + $0x12c] sm:$0xf]
    %v180 = vld [vmem:[#allocation5 + $0x130] sm:$0xf]
    %v181 = vld [vmem:[#allocation5 + $0x134] sm:$0xf]
    %v182 = vld [vmem:[#allocation5 + $0x138] sm:$0xf]
    %v183 = vld [vmem:[#allocation5 + $0x13c] sm:$0xf]
    %v184 = vld [vmem:[#allocation5 + $0x140] sm:$0xf]
    %v185 = vld [vmem:[#allocation5 + $0x144] sm:$0xf]
    %v186 = vld [vmem:[#allocation5 + $0x148] sm:$0xf]
    %v187 = vld [vmem:[#allocation5 + $0x14c] sm:$0xf]
    %v188 = vld [vmem:[#allocation5 + $0x150] sm:$0xf]
    %v189 = vld [vmem:[#allocation5 + $0x154] sm:$0xf]
    %v190 = vld [vmem:[#allocation5 + $0x158] sm:$0xf]
    %v191 = vld [vmem:[#allocation5 + $0x15c] sm:$0xf]
    %v192 = vld [vmem:[#allocation5 + $0x160] sm:$0xf]
    %v193 = vld [vmem:[#allocation5 + $0x164] sm:$0xf]
    %v194 = vld [vmem:[#allocation5 + $0x168] sm:$0xf]
    %v195 = vld [vmem:[#allocation5 + $0x16c] sm:$0xf]
    %v196 = vld [vmem:[#allocation5 + $0x170] sm:$0xf]
    %v197 = vld [vmem:[#allocation5 + $0x174] sm:$0xf]
    %v198 = vld [vmem:[#allocation5 + $0x178] sm:$0xf]
    %v199 = vld [vmem:[#allocation5 + $0x17c] sm:$0xf]
    %v200 = vld [vmem:[#allocation5 + $0x180] sm:$0xf]
    %v201 = vld [vmem:[#allocation5 + $0x184] sm:$0xf]
    %v202 = vld [vmem:[#allocation5 + $0x188] sm:$0xf]
    %v203 = vld [vmem:[#allocation5 + $0x18c] sm:$0xf]
    %v204 = vld [vmem:[#allocation5 + $0x190] sm:$0xf]
    %v205 = vld [vmem:[#allocation5 + $0x194] sm:$0xf]
    %v206 = vld [vmem:[#allocation5 + $0x198] sm:$0xf]
    %v207 = vld [vmem:[#allocation5 + $0x19c] sm:$0xf]
    %v208 = vld [vmem:[#allocation5 + $0x1a0] sm:$0xf]
    %v209 = vld [vmem:[#allocation5 + $0x1a4] sm:$0xf]
    %v210 = vld [vmem:[#allocation5 + $0x1a8] sm:$0xf]
    %v211 = vld [vmem:[#allocation5 + $0x1ac] sm:$0xf]
    %v212 = vld [vmem:[#allocation5 + $0x1b0] sm:$0xf]
    %v213 = vld [vmem:[#allocation5 + $0x1b4] sm:$0xf]
    %v214 = vld [vmem:[#allocation5 + $0x1b8] sm:$0xf]
    %v215 = vld [vmem:[#allocation5 + $0x1bc] sm:$0xf]
    %v216 = vld [vmem:[%s2] sm:$0x1]
    %v218 = vlaneseq
    %v219 = vshrl.u32 %v218, 7
    %v220 = vsub.s32 0, %v219
    %v221 = vrot.slane %v216, %v220
    %v227 = vunpack.c.l.b16 %v100
    %v228 = vunpack.c.h.b16 %v100
    %v229 = vunpack.c.l.b16 %v101
    %v230 = vunpack.c.h.b16 %v101
    %v231 = vunpack.c.l.b16 %v102
    %v232 = vunpack.c.h.b16 %v102
    %v233 = vunpack.c.l.b16 %v103
    %v234 = vpack.c.b16 %v227, %v227
    %v235 = vpack.c.b16 %v228, %v228
    %v236 = vpack.c.b16 %v229, %v229
    %v237 = vpack.c.b16 %v230, %v230
    %v238 = vpack.c.b16 %v231, %v231
    %v239 = vpack.c.b16 %v232, %v232
    %v240 = vpack.c.b16 %v233, %v233
    %v360 = vunpack.c.l.b16 %v104
    %v361 = vunpack.c.l.b16 %v105
    %v362 = vunpack.c.l.b16 %v106
    %v363 = vunpack.c.l.b16 %v107
    %v364 = vunpack.c.l.b16 %v108
    %v365 = vunpack.c.l.b16 %v109
    %v366 = vunpack.c.l.b16 %v110
    %v367 = vunpack.c.l.b16 %v111
    %v368 = vunpack.c.l.b16 %v112
    %v369 = vunpack.c.l.b16 %v113
    %v370 = vunpack.c.l.b16 %v114
    %v371 = vunpack.c.l.b16 %v115
    %v372 = vunpack.c.l.b16 %v116
    %v373 = vunpack.c.l.b16 %v117
    %v374 = vunpack.c.l.b16 %v118
    %v375 = vunpack.c.l.b16 %v119
    %v376 = vunpack.c.l.b16 %v120
    %v377 = vunpack.c.l.b16 %v121
    %v378 = vunpack.c.l.b16 %v122
    %v379 = vunpack.c.l.b16 %v123
    %v380 = vunpack.c.l.b16 %v124
    %v381 = vunpack.c.l.b16 %v125
    %v382 = vunpack.c.l.b16 %v126
    %v383 = vunpack.c.l.b16 %v127
    %v384 = vunpack.c.l.b16 %v128
    %v385 = vunpack.c.l.b16 %v129
    %v386 = vunpack.c.l.b16 %v130
    %v387 = vunpack.c.l.b16 %v131
    %v388 = vunpack.c.l.b16 %v132
    %v389 = vunpack.c.l.b16 %v133
    %v390 = vunpack.c.l.b16 %v134
    %v391 = vunpack.c.l.b16 %v135
    %v392 = vunpack.c.l.b16 %v136
    %v393 = vunpack.c.l.b16 %v137
    %v394 = vunpack.c.l.b16 %v138
    %v395 = vunpack.c.l.b16 %v139
    %v396 = vunpack.c.l.b16 %v140
    %v397 = vunpack.c.l.b16 %v141
    %v398 = vunpack.c.l.b16 %v142
    %v399 = vunpack.c.l.b16 %v143
    %v400 = vunpack.c.l.b16 %v144
    %v401 = vunpack.c.l.b16 %v145
    %v402 = vunpack.c.l.b16 %v146
    %v403 = vunpack.c.l.b16 %v147
    %v404 = vunpack.c.l.b16 %v148
    %v405 = vunpack.c.l.b16 %v149
    %v406 = vunpack.c.l.b16 %v150
    %v407 = vunpack.c.l.b16 %v151
    %v408 = vunpack.c.l.b16 %v152
    %v409 = vunpack.c.l.b16 %v153
    %v410 = vunpack.c.l.b16 %v154
    %v411 = vunpack.c.l.b16 %v155
    %v412 = vunpack.c.l.b16 %v156
    %v413 = vunpack.c.l.b16 %v157
    %v414 = vunpack.c.l.b16 %v158
    %v415 = vunpack.c.l.b16 %v159
    %v416 = vunpack.c.l.b16 %v160
    %v417 = vunpack.c.l.b16 %v161
    %v418 = vunpack.c.l.b16 %v162
    %v419 = vunpack.c.l.b16 %v163
    %v420 = vunpack.c.l.b16 %v164
    %v421 = vunpack.c.l.b16 %v165
    %v422 = vunpack.c.l.b16 %v166
    %v423 = vunpack.c.l.b16 %v167
    %v424 = vunpack.c.l.b16 %v168
    %v425 = vunpack.c.l.b16 %v169
    %v426 = vunpack.c.l.b16 %v170
    %v427 = vunpack.c.l.b16 %v171
    %v428 = vunpack.c.l.b16 %v172
    %v429 = vunpack.c.l.b16 %v173
    %v430 = vunpack.c.l.b16 %v174
    %v431 = vunpack.c.l.b16 %v175
    %v432 = vunpack.c.l.b16 %v176
    %v433 = vunpack.c.l.b16 %v177
    %v434 = vunpack.c.l.b16 %v178
    %v435 = vunpack.c.l.b16 %v179
    %v436 = vunpack.c.l.b16 %v180
    %v437 = vunpack.c.l.b16 %v181
    %v438 = vunpack.c.l.b16 %v182
    %v439 = vunpack.c.l.b16 %v183
    %v440 = vunpack.c.l.b16 %v184
    %v441 = vunpack.c.l.b16 %v185
    %v442 = vunpack.c.l.b16 %v186
    %v443 = vunpack.c.l.b16 %v187
    %v444 = vunpack.c.l.b16 %v188
    %v445 = vunpack.c.l.b16 %v189
    %v446 = vunpack.c.l.b16 %v190
    %v447 = vunpack.c.l.b16 %v191
    %v448 = vunpack.c.l.b16 %v192
    %v449 = vunpack.c.l.b16 %v193
    %v450 = vunpack.c.l.b16 %v194
    %v451 = vunpack.c.l.b16 %v195
    %v452 = vunpack.c.l.b16 %v196
    %v453 = vunpack.c.l.b16 %v197
    %v454 = vunpack.c.l.b16 %v198
    %v455 = vunpack.c.l.b16 %v199
    %v456 = vunpack.c.l.b16 %v200
    %v457 = vunpack.c.l.b16 %v201
    %v458 = vunpack.c.l.b16 %v202
    %v459 = vunpack.c.l.b16 %v203
    %v460 = vunpack.c.l.b16 %v204
    %v461 = vunpack.c.l.b16 %v205
    %v462 = vunpack.c.l.b16 %v206
    %v463 = vunpack.c.l.b16 %v207
    %v464 = vunpack.c.l.b16 %v208
    %v465 = vunpack.c.l.b16 %v209
    %v466 = vunpack.c.l.b16 %v210
    %v467 = vunpack.c.l.b16 %v211
    %v468 = vunpack.c.l.b16 %v212
    %v469 = vunpack.c.l.b16 %v213
    %v470 = vunpack.c.l.b16 %v214
    %v471 = vunpack.c.l.b16 %v215
    %v472 = vpack.c.b16 %v361, %v360
    %v473 = vpack.c.b16 %v363, %v362
    %v474 = vpack.c.b16 %v365, %v364
    %v475 = vpack.c.b16 %v367, %v366
    %v476 = vpack.c.b16 %v369, %v368
    %v477 = vpack.c.b16 %v371, %v370
    %v478 = vpack.c.b16 %v373, %v372
    %v479 = vpack.c.b16 %v375, %v374
    %v480 = vpack.c.b16 %v377, %v376
    %v481 = vpack.c.b16 %v379, %v378
    %v482 = vpack.c.b16 %v381, %v380
    %v483 = vpack.c.b16 %v383, %v382
    %v484 = vpack.c.b16 %v385, %v384
    %v485 = vpack.c.b16 %v387, %v386
    %v486 = vpack.c.b16 %v389, %v388
    %v487 = vpack.c.b16 %v391, %v390
    %v488 = vpack.c.b16 %v393, %v392
    %v489 = vpack.c.b16 %v395, %v394
    %v490 = vpack.c.b16 %v397, %v396
    %v491 = vpack.c.b16 %v399, %v398
    %v492 = vpack.c.b16 %v401, %v400
    %v493 = vpack.c.b16 %v403, %v402
    %v494 = vpack.c.b16 %v405, %v404
    %v495 = vpack.c.b16 %v407, %v406
    %v496 = vpack.c.b16 %v409, %v408
    %v497 = vpack.c.b16 %v411, %v410
    %v498 = vpack.c.b16 %v413, %v412
    %v499 = vpack.c.b16 %v415, %v414
    %v500 = vpack.c.b16 %v417, %v416
    %v501 = vpack.c.b16 %v419, %v418
    %v502 = vpack.c.b16 %v421, %v420
    %v503 = vpack.c.b16 %v423, %v422
    %v504 = vpack.c.b16 %v425, %v424
    %v505 = vpack.c.b16 %v427, %v426
    %v506 = vpack.c.b16 %v429, %v428
    %v507 = vpack.c.b16 %v431, %v430
    %v508 = vpack.c.b16 %v433, %v432
    %v509 = vpack.c.b16 %v435, %v434
    %v510 = vpack.c.b16 %v437, %v436
    %v511 = vpack.c.b16 %v439, %v438
    %v512 = vpack.c.b16 %v441, %v440
    %v513 = vpack.c.b16 %v443, %v442
    %v514 = vpack.c.b16 %v445, %v444
    %v515 = vpack.c.b16 %v447, %v446
    %v516 = vpack.c.b16 %v449, %v448
    %v517 = vpack.c.b16 %v451, %v450
    %v518 = vpack.c.b16 %v453, %v452
    %v519 = vpack.c.b16 %v455, %v454
    %v520 = vpack.c.b16 %v457, %v456
    %v521 = vpack.c.b16 %v459, %v458
    %v522 = vpack.c.b16 %v461, %v460
    %v523 = vpack.c.b16 %v463, %v462
    %v524 = vpack.c.b16 %v465, %v464
    %v525 = vpack.c.b16 %v467, %v466
    %v526 = vpack.c.b16 %v469, %v468
    %v527 = vpack.c.b16 %v471, %v470
    %584 = vmatprep.subr.bf16.mxu0 0
    %585 = vmatpush1.bf16.msra.mxu0 %v479
    %586 = vmatprep.subr.bf16.mxu0 0
    %587 = vmatpush1.bf16.msra.mxu0 %v478
    %588 = vmatprep.subr.bf16.mxu0 0
    %589 = vmatpush1.bf16.msra.mxu0 %v477
    %590 = vmatprep.subr.bf16.mxu0 0
    %591 = vmatpush1.bf16.msra.mxu0 %v476
    %592 = vmatprep.subr.bf16.mxu0 0
    %593 = vmatpush1.bf16.msra.mxu0 %v475
    %594 = vmatprep.subr.bf16.mxu0 0
    %595 = vmatpush1.bf16.msra.mxu0 %v474
    %596 = vmatprep.subr.bf16.mxu0 0
    %597 = vmatpush1.bf16.msra.mxu0 %v473
    %598 = vmatprep.subr.bf16.mxu0 0
    %599 = vmatpush1.bf16.msra.mxu0 %v472
    %600 = vmatprep.subr.bf16.mxu0 0
    %601 = vmatpush2.bf16.msra.mxu0 %v487
    %602 = vmatprep.subr.bf16.mxu0 0
    %603 = vmatpush2.bf16.msra.mxu0 %v486
    %604 = vmatprep.subr.bf16.mxu0 0
    %605 = vmatpush2.bf16.msra.mxu0 %v485
    %606 = vmatprep.subr.bf16.mxu0 0
    %607 = vmatpush2.bf16.msra.mxu0 %v484
    %608 = vmatprep.subr.bf16.mxu0 0
    %609 = vmatpush2.bf16.msra.mxu0 %v483
    %610 = vmatprep.subr.bf16.mxu0 0
    %611 = vmatpush2.bf16.msra.mxu0 %v482
    %612 = vmatprep.subr.bf16.mxu0 0
    %613 = vmatpush2.bf16.msra.mxu0 %v481
    %614 = vmatprep.subr.bf16.mxu0 0
    %615 = vmatpush2.bf16.msra.mxu0 %v480
    %616 = vmatprep.mubr.bf16.mxu0 %v235
    %617 = vmatmul.mubr.bf16.gmra.mxu0 %v234
    %v618 = vpop.f32.mrf.mxu0
    %v619 = vadd.f32 %v221, %v618
    %v620 = vpop.f32.mrf.mxu0
    %v621 = vpop.f32.mrf.mxu0
    %v622 = vpop.f32.mrf.mxu0
    %623 = vdwg.mxu0
    %624 = vmatprep.subr.bf16.mxu0 0
    %625 = vmatpush1.bf16.msra.mxu0 %v495
    %626 = vmatprep.subr.bf16.mxu0 0
    %627 = vmatpush1.bf16.msra.mxu0 %v494
    %628 = vmatprep.subr.bf16.mxu0 0
    %629 = vmatpush1.bf16.msra.mxu0 %v493
    %630 = vmatprep.subr.bf16.mxu0 0
    %631 = vmatpush1.bf16.msra.mxu0 %v492
    %632 = vmatprep.subr.bf16.mxu0 0
    %633 = vmatpush1.bf16.msra.mxu0 %v491
    %634 = vmatprep.subr.bf16.mxu0 0
    %635 = vmatpush1.bf16.msra.mxu0 %v490
    %636 = vmatprep.subr.bf16.mxu0 0
    %637 = vmatpush1.bf16.msra.mxu0 %v489
    %638 = vmatprep.subr.bf16.mxu0 0
    %639 = vmatpush1.bf16.msra.mxu0 %v488
    %640 = vmatprep.subr.bf16.mxu0 0
    %641 = vmatpush2.bf16.msra.mxu0 %v503
    %642 = vmatprep.subr.bf16.mxu0 0
    %643 = vmatpush2.bf16.msra.mxu0 %v502
    %644 = vmatprep.subr.bf16.mxu0 0
    %645 = vmatpush2.bf16.msra.mxu0 %v501
    %646 = vmatprep.subr.bf16.mxu0 0
    %647 = vmatpush2.bf16.msra.mxu0 %v500
    %648 = vmatprep.subr.bf16.mxu0 0
    %649 = vmatpush2.bf16.msra.mxu0 %v499
    %650 = vmatprep.subr.bf16.mxu0 0
    %651 = vmatpush2.bf16.msra.mxu0 %v498
    %652 = vmatprep.subr.bf16.mxu0 0
    %653 = vmatpush2.bf16.msra.mxu0 %v497
    %654 = vmatprep.subr.bf16.mxu0 0
    %655 = vmatpush2.bf16.msra.mxu0 %v496
    %656 = vmatprep.mubr.bf16.mxu0 %v237
    %657 = vmatmul.mubr.bf16.gmra.mxu0 %v236
    %v658 = vpop.f32.mrf.mxu0
    %v659 = vadd.f32 %v619, %v658
    %v660 = vpop.f32.mrf.mxu0
    %v661 = vpop.f32.mrf.mxu0
    %v662 = vpop.f32.mrf.mxu0
    %663 = vdwg.mxu0
    %664 = vmatprep.subr.bf16.mxu0 0
    %665 = vmatpush1.bf16.msra.mxu0 %v511
    %666 = vmatprep.subr.bf16.mxu0 0
    %667 = vmatpush1.bf16.msra.mxu0 %v510
    %668 = vmatprep.subr.bf16.mxu0 0
    %669 = vmatpush1.bf16.msra.mxu0 %v509
    %670 = vmatprep.subr.bf16.mxu0 0
    %671 = vmatpush1.bf16.msra.mxu0 %v508
    %672 = vmatprep.subr.bf16.mxu0 0
    %673 = vmatpush1.bf16.msra.mxu0 %v507
    %674 = vmatprep.subr.bf16.mxu0 0
    %675 = vmatpush1.bf16.msra.mxu0 %v506
    %676 = vmatprep.subr.bf16.mxu0 0
    %677 = vmatpush1.bf16.msra.mxu0 %v505
    %678 = vmatprep.subr.bf16.mxu0 0
    %679 = vmatpush1.bf16.msra.mxu0 %v504
    %680 = vmatprep.subr.bf16.mxu0 0
    %681 = vmatpush2.bf16.msra.mxu0 %v519
    %682 = vmatprep.subr.bf16.mxu0 0
    %683 = vmatpush2.bf16.msra.mxu0 %v518
    %684 = vmatprep.subr.bf16.mxu0 0
    %685 = vmatpush2.bf16.msra.mxu0 %v517
    %686 = vmatprep.subr.bf16.mxu0 0
    %687 = vmatpush2.bf16.msra.mxu0 %v516
    %688 = vmatprep.subr.bf16.mxu0 0
    %689 = vmatpush2.bf16.msra.mxu0 %v515
    %690 = vmatprep.subr.bf16.mxu0 0
    %691 = vmatpush2.bf16.msra.mxu0 %v514
    %692 = vmatprep.subr.bf16.mxu0 0
    %693 = vmatpush2.bf16.msra.mxu0 %v513
    %694 = vmatprep.subr.bf16.mxu0 0
    %695 = vmatpush2.bf16.msra.mxu0 %v512
    %696 = vmatprep.mubr.bf16.mxu0 %v239
    %697 = vmatmul.mubr.bf16.gmra.mxu0 %v238
    %v698 = vpop.f32.mrf.mxu0
    %v699 = vadd.f32 %v659, %v698
    %v700 = vpop.f32.mrf.mxu0
    %v701 = vpop.f32.mrf.mxu0
    %v702 = vpop.f32.mrf.mxu0
    %703 = vdwg.mxu0
    %704 = vmatprep.subr.bf16.mxu0 0
    %705 = vmatpush1.bf16.msra.mxu0 %v527
    %706 = vmatprep.subr.bf16.mxu0 0
    %707 = vmatpush1.bf16.msra.mxu0 %v526
    %708 = vmatprep.subr.bf16.mxu0 0
    %709 = vmatpush1.bf16.msra.mxu0 %v525
    %710 = vmatprep.subr.bf16.mxu0 0
    %711 = vmatpush1.bf16.msra.mxu0 %v524
    %712 = vmatprep.subr.bf16.mxu0 0
    %713 = vmatpush1.bf16.msra.mxu0 %v523
    %714 = vmatprep.subr.bf16.mxu0 0
    %715 = vmatpush1.bf16.msra.mxu0 %v522
    %716 = vmatprep.subr.bf16.mxu0 0
    %717 = vmatpush1.bf16.msra.mxu0 %v521
    %718 = vmatprep.subr.bf16.mxu0 0
    %719 = vmatpush1.bf16.msra.mxu0 %v520
    %720 = vmatprep.subr.bf16.mxu0 0
    %721 = vmatpush2.bf16.msra.mxu0 0
    %722 = vmatprep.subr.bf16.mxu0 0
    %723 = vmatpush2.bf16.msra.mxu0 0
    %724 = vmatprep.subr.bf16.mxu0 0
    %725 = vmatpush2.bf16.msra.mxu0 0
    %726 = vmatprep.subr.bf16.mxu0 0
    %727 = vmatpush2.bf16.msra.mxu0 0
    %728 = vmatprep.subr.bf16.mxu0 0
    %729 = vmatpush2.bf16.msra.mxu0 0
    %730 = vmatprep.subr.bf16.mxu0 0
    %731 = vmatpush2.bf16.msra.mxu0 0
    %732 = vmatprep.subr.bf16.mxu0 0
    %733 = vmatpush2.bf16.msra.mxu0 0
    %734 = vmatprep.subr.bf16.mxu0 0
    %735 = vmatpush2.bf16.msra.mxu0 0
    %736 = vmatprep.mubr.bf16.mxu0 0
    %737 = vmatmul.mubr.bf16.gmra.mxu0 %v240
    %v738 = vpop.f32.mrf.mxu0
    %v739 = vadd.f32 %v699, %v738
    %v740 = vpop.f32.mrf.mxu0
    %v741 = vpop.f32.mrf.mxu0
    %v742 = vpop.f32.mrf.mxu0
    %743 = vdwg.mxu0
    %v744 = vmax.f32 %v739, 0.0
    %v745 = vpack.c.bf16 %v744, %v744
    %v746 = vld [vmem:[#allocation7] sm:$0xf]
    %v747 = vld [vmem:[#allocation7 + $0x4] sm:$0xf]
    %v748 = vld [vmem:[#allocation7 + $0x8] sm:$0xf]
    %v749 = vld [vmem:[#allocation7 + $0xc] sm:$0xf]
    %v750 = vld [vmem:[#allocation7 + $0x10] sm:$0xf]
    %v751 = vld [vmem:[#allocation7 + $0x14] sm:$0xf]
    %v752 = vld [vmem:[#allocation7 + $0x18] sm:$0xf]
    %v753 = vld [vmem:[#allocation7 + $0x1c] sm:$0xf]
    %v754 = vld [vmem:[#allocation7 + $0x20] sm:$0xf]
    %v755 = vld [vmem:[#allocation7 + $0x24] sm:$0xf]
    %v756 = vld [vmem:[#allocation7 + $0x28] sm:$0xf]
    %v757 = vld [vmem:[#allocation7 + $0x2c] sm:$0xf]
    %v758 = vld [vmem:[#allocation7 + $0x30] sm:$0xf]
    %v759 = vld [vmem:[#allocation7 + $0x34] sm:$0xf]
    %v760 = vld [vmem:[#allocation7 + $0x38] sm:$0xf]
    %v761 = vld [vmem:[#allocation7 + $0x3c] sm:$0xf]
    %v762 = vld [vmem:[%s4] sm:$0x1]
    %v764 = vlaneseq
    %v765 = vshrl.u32 %v764, 7
    %v766 = vsub.s32 0, %v765
    %v767 = vrot.slane %v762, %v766
    %v785 = vunpack.c.l.b16 %v746
    %v786 = vunpack.c.l.b16 %v747
    %v787 = vunpack.c.l.b16 %v748
    %v788 = vunpack.c.l.b16 %v749
    %v789 = vunpack.c.l.b16 %v750
    %v790 = vunpack.c.l.b16 %v751
    %v791 = vunpack.c.l.b16 %v752
    %v792 = vunpack.c.l.b16 %v753
    %v793 = vunpack.c.l.b16 %v754
    %v794 = vunpack.c.l.b16 %v755
    %v795 = vunpack.c.l.b16 %v756
    %v796 = vunpack.c.l.b16 %v757
    %v797 = vunpack.c.l.b16 %v758
    %v798 = vunpack.c.l.b16 %v759
    %v799 = vunpack.c.l.b16 %v760
    %v800 = vunpack.c.l.b16 %v761
    %v801 = vpack.c.b16 %v786, %v785
    %v802 = vpack.c.b16 %v788, %v787
    %v803 = vpack.c.b16 %v790, %v789
    %v804 = vpack.c.b16 %v792, %v791
    %v805 = vpack.c.b16 %v794, %v793
    %v806 = vpack.c.b16 %v796, %v795
    %v807 = vpack.c.b16 %v798, %v797
    %v808 = vpack.c.b16 %v800, %v799
    %817 = vmatprep.subr.bf16.mxu0 0
    %818 = vmatpush1.bf16.msra.mxu0 %v808
    %819 = vmatprep.subr.bf16.mxu0 0
    %820 = vmatpush1.bf16.msra.mxu0 %v807
    %821 = vmatprep.subr.bf16.mxu0 0
    %822 = vmatpush1.bf16.msra.mxu0 %v806
    %823 = vmatprep.subr.bf16.mxu0 0
    %824 = vmatpush1.bf16.msra.mxu0 %v805
    %825 = vmatprep.subr.bf16.mxu0 0
    %826 = vmatpush1.bf16.msra.mxu0 %v804
    %827 = vmatprep.subr.bf16.mxu0 0
    %828 = vmatpush1.bf16.msra.mxu0 %v803
    %829 = vmatprep.subr.bf16.mxu0 0
    %830 = vmatpush1.bf16.msra.mxu0 %v802
    %831 = vmatprep.subr.bf16.mxu0 0
    %832 = vmatpush1.bf16.msra.mxu0 %v801
    %833 = vmatprep.subr.bf16.mxu0 0
    %834 = vmatpush2.bf16.msra.mxu0 0
    %835 = vmatprep.subr.bf16.mxu0 0
    %836 = vmatpush2.bf16.msra.mxu0 0
    %837 = vmatprep.subr.bf16.mxu0 0
    %838 = vmatpush2.bf16.msra.mxu0 0
    %839 = vmatprep.subr.bf16.mxu0 0
    %840 = vmatpush2.bf16.msra.mxu0 0
    %841 = vmatprep.subr.bf16.mxu0 0
    %842 = vmatpush2.bf16.msra.mxu0 0
    %843 = vmatprep.subr.bf16.mxu0 0
    %844 = vmatpush2.bf16.msra.mxu0 0
    %845 = vmatprep.subr.bf16.mxu0 0
    %846 = vmatpush2.bf16.msra.mxu0 0
    %847 = vmatprep.subr.bf16.mxu0 0
    %848 = vmatpush2.bf16.msra.mxu0 0
    %849 = vmatprep.mubr.bf16.mxu0 0
    %850 = vmatmul.mubr.bf16.gmra.mxu0 %v745
    %v851 = vpop.f32.mrf.mxu0
    %v852 = vadd.f32 %v767, %v851
    %v853 = vpop.f32.mrf.mxu0
    %v854 = vpop.f32.mrf.mxu0
    %v855 = vpop.f32.mrf.mxu0
    %856 = vdwg.mxu0
    %v857 = vmax.f32 %v852, 0.0
    %v858 = vpack.c.bf16 %v857, %v857
    %v859 = vld [vmem:[#allocation8] sm:$0xf]
    %v860 = vld [vmem:[#allocation8 + $0x4] sm:$0xf]
    %v861 = vld [vmem:[#allocation8 + $0x8] sm:$0xf]
    %v862 = vld [vmem:[#allocation8 + $0xc] sm:$0xf]
    %v863 = vld [vmem:[#allocation8 + $0x10] sm:$0xf]
    %v864 = vld [vmem:[#allocation8 + $0x14] sm:$0xf]
    %v865 = vld [vmem:[#allocation8 + $0x18] sm:$0xf]
    %v866 = vld [vmem:[#allocation8 + $0x1c] sm:$0xf]
    %v867 = vld [vmem:[#allocation8 + $0x20] sm:$0xf]
    %v868 = vld [vmem:[#allocation8 + $0x24] sm:$0xf]
    %v869 = vld [vmem:[#allocation8 + $0x28] sm:$0xf]
    %v870 = vld [vmem:[#allocation8 + $0x2c] sm:$0xf]
    %v871 = vld [vmem:[#allocation8 + $0x30] sm:$0xf]
    %v872 = vld [vmem:[#allocation8 + $0x34] sm:$0xf]
    %v873 = vld [vmem:[#allocation8 + $0x38] sm:$0xf]
    %v874 = vld [vmem:[#allocation8 + $0x3c] sm:$0xf]
    %v875 = vld [vmem:[%s6] sm:$0x1]
    %v877 = vlaneseq
    %v878 = vshrl.u32 %v877, 7
    %v879 = vsub.s32 0, %v878
    %v880 = vrot.slane %v875, %v879
    %v898 = vunpack.c.l.b16 %v859
    %v899 = vunpack.c.l.b16 %v860
    %v900 = vunpack.c.l.b16 %v861
    %v901 = vunpack.c.l.b16 %v862
    %v902 = vunpack.c.l.b16 %v863
    %v903 = vunpack.c.l.b16 %v864
    %v904 = vunpack.c.l.b16 %v865
    %v905 = vunpack.c.l.b16 %v866
    %v906 = vunpack.c.l.b16 %v867
    %v907 = vunpack.c.l.b16 %v868
    %v908 = vunpack.c.l.b16 %v869
    %v909 = vunpack.c.l.b16 %v870
    %v910 = vunpack.c.l.b16 %v871
    %v911 = vunpack.c.l.b16 %v872
    %v912 = vunpack.c.l.b16 %v873
    %v913 = vunpack.c.l.b16 %v874
    %v914 = vpack.c.b16 %v899, %v898
    %v915 = vpack.c.b16 %v901, %v900
    %v916 = vpack.c.b16 %v903, %v902
    %v917 = vpack.c.b16 %v905, %v904
    %v918 = vpack.c.b16 %v907, %v906
    %v919 = vpack.c.b16 %v909, %v908
    %v920 = vpack.c.b16 %v911, %v910
    %v921 = vpack.c.b16 %v913, %v912
    %930 = vmatprep.subr.bf16.mxu0 0
    %931 = vmatpush1.bf16.msra.mxu0 %v921
    %932 = vmatprep.subr.bf16.mxu0 0
    %933 = vmatpush1.bf16.msra.mxu0 %v920
    %934 = vmatprep.subr.bf16.mxu0 0
    %935 = vmatpush1.bf16.msra.mxu0 %v919
    %936 = vmatprep.subr.bf16.mxu0 0
    %937 = vmatpush1.bf16.msra.mxu0 %v918
    %938 = vmatprep.subr.bf16.mxu0 0
    %939 = vmatpush1.bf16.msra.mxu0 %v917
    %940 = vmatprep.subr.bf16.mxu0 0
    %941 = vmatpush1.bf16.msra.mxu0 %v916
    %942 = vmatprep.subr.bf16.mxu0 0
    %943 = vmatpush1.bf16.msra.mxu0 %v915
    %944 = vmatprep.subr.bf16.mxu0 0
    %945 = vmatpush1.bf16.msra.mxu0 %v914
    %946 = vmatprep.subr.bf16.mxu0 0
    %947 = vmatpush2.bf16.msra.mxu0 0
    %948 = vmatprep.subr.bf16.mxu0 0
    %949 = vmatpush2.bf16.msra.mxu0 0
    %950 = vmatprep.subr.bf16.mxu0 0
    %951 = vmatpush2.bf16.msra.mxu0 0
    %952 = vmatprep.subr.bf16.mxu0 0
    %953 = vmatpush2.bf16.msra.mxu0 0
    %954 = vmatprep.subr.bf16.mxu0 0
    %955 = vmatpush2.bf16.msra.mxu0 0
    %956 = vmatprep.subr.bf16.mxu0 0
    %957 = vmatpush2.bf16.msra.mxu0 0
    %958 = vmatprep.subr.bf16.mxu0 0
    %959 = vmatpush2.bf16.msra.mxu0 0
    %960 = vmatprep.subr.bf16.mxu0 0
    %961 = vmatpush2.bf16.msra.mxu0 0
    %962 = vmatprep.mubr.bf16.mxu0 0
    %963 = vmatmul.mubr.bf16.gmra.mxu0 %v858
    %v964 = vpop.f32.mrf.mxu0
    %v965 = vadd.f32 %v880, %v964
    %v966 = vpop.f32.mrf.mxu0
    %v967 = vpop.f32.mrf.mxu0
    %v968 = vpop.f32.mrf.mxu0
    %969 = vdwg.mxu0
    %v970 = vmax.f32 %v965, 0.0
    %v971 = vpack.c.bf16 %v970, %v970
    %v972 = vld [vmem:[#allocation10] sm:$0xf]
    %v973 = vld [vmem:[#allocation10 + $0x4] sm:$0xf]
    %v974 = vld [vmem:[#allocation10 + $0x8] sm:$0xf]
    %v975 = vld [vmem:[#allocation10 + $0xc] sm:$0xf]
    %v976 = vld [vmem:[#allocation10 + $0x10] sm:$0xf]
    %v977 = vld [vmem:[#allocation10 + $0x14] sm:$0xf]
    %v978 = vld [vmem:[#allocation10 + $0x18] sm:$0xf]
    %v979 = vld [vmem:[#allocation10 + $0x1c] sm:$0xf]
    %v980 = vld [vmem:[#allocation10 + $0x20] sm:$0xf]
    %v981 = vld [vmem:[#allocation10 + $0x24] sm:$0xf]
    %v982 = vld [vmem:[#allocation10 + $0x28] sm:$0xf]
    %v983 = vld [vmem:[#allocation10 + $0x2c] sm:$0xf]
    %v984 = vld [vmem:[#allocation10 + $0x30] sm:$0xf]
    %v985 = vld [vmem:[#allocation10 + $0x34] sm:$0xf]
    %v986 = vld [vmem:[#allocation10 + $0x38] sm:$0xf]
    %v987 = vld [vmem:[#allocation10 + $0x3c] sm:$0xf]
    %v988 = vld [vmem:[%s8] sm:$0x1]
    %v990 = vlaneseq
    %v991 = vshrl.u32 %v990, 7
    %v992 = vsub.s32 0, %v991
    %v993 = vrot.slane %v988, %v992
    %v1011 = vunpack.c.l.b16 %v972
    %v1012 = vunpack.c.l.b16 %v973
    %v1013 = vunpack.c.l.b16 %v974
    %v1014 = vunpack.c.l.b16 %v975
    %v1015 = vunpack.c.l.b16 %v976
    %v1016 = vunpack.c.l.b16 %v977
    %v1017 = vunpack.c.l.b16 %v978
    %v1018 = vunpack.c.l.b16 %v979
    %v1019 = vunpack.c.l.b16 %v980
    %v1020 = vunpack.c.l.b16 %v981
    %v1021 = vunpack.c.l.b16 %v982
    %v1022 = vunpack.c.l.b16 %v983
    %v1023 = vunpack.c.l.b16 %v984
    %v1024 = vunpack.c.l.b16 %v985
    %v1025 = vunpack.c.l.b16 %v986
    %v1026 = vunpack.c.l.b16 %v987
    %v1027 = vpack.c.b16 %v1012, %v1011
    %v1028 = vpack.c.b16 %v1014, %v1013
    %v1029 = vpack.c.b16 %v1016, %v1015
    %v1030 = vpack.c.b16 %v1018, %v1017
    %v1031 = vpack.c.b16 %v1020, %v1019
    %v1032 = vpack.c.b16 %v1022, %v1021
    %v1033 = vpack.c.b16 %v1024, %v1023
    %v1034 = vpack.c.b16 %v1026, %v1025
    %1043 = vmatprep.subr.bf16.mxu0 0
    %1044 = vmatpush1.bf16.msra.mxu0 %v1034
    %1045 = vmatprep.subr.bf16.mxu0 0
    %1046 = vmatpush1.bf16.msra.mxu0 %v1033
    %1047 = vmatprep.subr.bf16.mxu0 0
    %1048 = vmatpush1.bf16.msra.mxu0 %v1032
    %1049 = vmatprep.subr.bf16.mxu0 0
    %1050 = vmatpush1.bf16.msra.mxu0 %v1031
    %1051 = vmatprep.subr.bf16.mxu0 0
    %1052 = vmatpush1.bf16.msra.mxu0 %v1030
    %1053 = vmatprep.subr.bf16.mxu0 0
    %1054 = vmatpush1.bf16.msra.mxu0 %v1029
    %1055 = vmatprep.subr.bf16.mxu0 0
    %1056 = vmatpush1.bf16.msra.mxu0 %v1028
    %1057 = vmatprep.subr.bf16.mxu0 0
    %1058 = vmatpush1.bf16.msra.mxu0 %v1027
    %1059 = vmatprep.subr.bf16.mxu0 0
    %1060 = vmatpush2.bf16.msra.mxu0 0
    %1061 = vmatprep.subr.bf16.mxu0 0
    %1062 = vmatpush2.bf16.msra.mxu0 0
    %1063 = vmatprep.subr.bf16.mxu0 0
    %1064 = vmatpush2.bf16.msra.mxu0 0
    %1065 = vmatprep.subr.bf16.mxu0 0
    %1066 = vmatpush2.bf16.msra.mxu0 0
    %1067 = vmatprep.subr.bf16.mxu0 0
    %1068 = vmatpush2.bf16.msra.mxu0 0
    %1069 = vmatprep.subr.bf16.mxu0 0
    %1070 = vmatpush2.bf16.msra.mxu0 0
    %1071 = vmatprep.subr.bf16.mxu0 0
    %1072 = vmatpush2.bf16.msra.mxu0 0
    %1073 = vmatprep.subr.bf16.mxu0 0
    %1074 = vmatpush2.bf16.msra.mxu0 0
    %1075 = vmatprep.mubr.bf16.mxu0 0
    %1076 = vmatmul.mubr.bf16.gmra.mxu0 %v971
    %v1077 = vpop.f32.mrf.mxu0
    %v1078 = vadd.f32 %v993, %v1077
    %v1079 = vpop.f32.mrf.mxu0
    %v1080 = vpop.f32.mrf.mxu0
    %v1081 = vpop.f32.mrf.mxu0
    %1082 = vdwg.mxu0
    %1083 = vst [vmem:[#allocation11] sm:$0xff] %v1078
    // Predicated region
    $region58: #{tpu_custom_call.1} parent=1 // pred_check
      _
    $region59: #{tpu_custom_call.1} parent=1 // pred_check_branch
      %1085 = sbr.rel (0) target = $region61
    $region60: #{tpu_custom_call.1} parent=1 // pred_region
      %s1087 = ssub.s32 128, 128
      %1088 = vsyncadd [#allocation4], %s1087
      %s1090 = sshll.u32 [#allocation11], 4
      %s1091 = int_to_ptr.vmem [resolvable:$true] %s1090
      %1093 = dma.vmem_to_hbm [thread:$0]  %s1091, 128, %s9, [#allocation4]
    $region61: #{tpu_custom_call.1} parent=1 // pred_fallthru
      _
    // Predicated region
    $region62: #{tpu_custom_call.1} parent=1 // pred_check
      _
    $region63: #{tpu_custom_call.1} parent=1 // pred_check_branch
      %1095 = sbr.rel (0) target = $region65
    $region64: #{tpu_custom_call.1} parent=1 // pred_region
      %1096 = dma.done [#allocation4], 128
    $region65: #{tpu_custom_call.1} parent=1 // pred_fallthru
      _
    %1097 = vsyncpa [#allocation3], 1
    %1098 = vsyncpa [#allocation6], 1
    %1099 = vsyncpa [#allocation9], 1
    %1100 = vsyncpa [#allocation4], 1

</llo_original>
